<compile_context>
chip_gen: v7x
topology: tpu7x:2x2x1
jax: 0.10.0
libtpu: 0.0.40
codegen_flags: <defaults>
</compile_context>

<pallas_src>
import jax
import jax.numpy as jnp
from jax.experimental import pallas as pl
from jax.experimental.pallas import tpu as pltpu


D_IN, D_H, D_OUT = 5, 8, 10


def _cdiv(a, b):
    return -(-a // b)


def _round_up(v, m):
    return ((v + m - 1) // m) * m


def _pick_batch_tile(B, tm_max, align):
    """Whole batch in one block if it fits; otherwise ~tm_max rows rounded to
    `align`, preferring an even block count (v7x has 2 TensorCores sharing the
    'parallel' grid axis)."""
    if B <= tm_max:
        return B                       # block dim == full array dim -> always legal
    n = _cdiv(B, tm_max)
    if n % 2:                          # best-effort even split across 2 TCs
        n += 1
    return _round_up(_cdiv(B, n), align)


# ----------------------------------------------------------------------------
# Kernels
# ----------------------------------------------------------------------------
def _mlp_kernel(x_ref, w1_ref, b1_ref, w2_ref, b2_ref, o_ref):
    # x_ref: (TM, D_IN); w1_ref: (D_IN, D_H); b1_ref: (1, D_H)
    # w2_ref: (D_H, D_OUT); b2_ref: (1, D_OUT); o_ref: (TM, D_OUT)
    h = jnp.dot(x_ref[...], w1_ref[...], preferred_element_type=jnp.float32)
    h = jnp.maximum(h + b1_ref[...], 0.0)           # bias add: VPU broadcast (free slot)
    z = jnp.dot(h, w2_ref[...], preferred_element_type=jnp.float32) + b2_ref[...]
    # sigmoid: exp lands on the EUP; exact divide kept for f32-accurate output
    # (pl.reciprocal(..., approx=True) is available if the VALU ever binds).
    o_ref[...] = (1.0 / (1.0 + jnp.exp(-z))).astype(o_ref.dtype)


def _mlp_kernel_t(xt_ref, w1t_ref, b1_ref, w2t_ref, b2_ref, o_ref):
    # Lane-dense variant: batch on the lane axis.
    # xt_ref: (D_IN, TM); w1t_ref: (D_H, D_IN); b1_ref: (D_H, 1)
    # w2t_ref: (D_OUT, D_H); b2_ref: (D_OUT, 1); o_ref: (D_OUT, TM)
    h = jnp.dot(w1t_ref[...], xt_ref[...], preferred_element_type=jnp.float32)
    h = jnp.maximum(h + b1_ref[...], 0.0)
    z = jnp.dot(w2t_ref[...], h, preferred_element_type=jnp.float32) + b2_ref[...]
    o_ref[...] = (1.0 / (1.0 + jnp.exp(-z))).astype(o_ref.dtype)


# ----------------------------------------------------------------------------
# Wrappers
# ----------------------------------------------------------------------------
def mlp_forward(x, w1, b1, w2, b2, *, tm_max=2048, small_batch_threshold=1024,
                force_pallas=False):
    """out = sigmoid(relu(x @ w1 + b1) @ w2 + b2), shape (B, 10).

    Weights are stored (in, out): x @ W + b == PyTorch's x @ W_pt.T + b.
    """
    B, d_in = x.shape
    d_out = w2.shape[1]

    x = x.astype(jnp.float32)
    w1 = w1.astype(jnp.float32)
    w2 = w2.astype(jnp.float32)
    b1r = b1.reshape(1, -1).astype(jnp.float32)
    b2r = b2.reshape(1, -1).astype(jnp.float32)

    if B < small_batch_threshold and not force_pallas:
        # Tiny-batch fallback: kernel dispatch + pipeline prologue dwarf the math.
        return jax.nn.sigmoid(jnp.maximum(x @ w1 + b1r, 0.0) @ w2 + b2r)

    # Batch tile (sublane-aligned). Working set at tm=2048 is only a few MiB
    # even with lane padding -> no vmem_limit_bytes override needed on v5e/v6e/v7x.
    tm = _pick_batch_tile(B, tm_max, align=8)
    n_blocks = _cdiv(B, tm)

    return pl.pallas_call(
        _mlp_kernel,
        out_shape=jax.ShapeDtypeStruct((B, d_out), jnp.float32),
        grid=(n_blocks,),
        in_specs=[
            pl.BlockSpec((tm, d_in), lambda i: (i, 0)),      # streamed over batch
            pl.BlockSpec(w1.shape, lambda i: (0, 0)),        # resident tiny weights
            pl.BlockSpec(b1r.shape, lambda i: (0, 0)),
            pl.BlockSpec(w2.shape, lambda i: (0, 0)),
            pl.BlockSpec(b2r.shape, lambda i: (0, 0)),
        ],
        # Ragged final block is clipped by Pallas on store (garbage rows read in
        # the tail block are never written back; rows are independent).
        out_specs=pl.BlockSpec((tm, d_out), lambda i: (i, 0)),
        compiler_params=pltpu.CompilerParams(
            dimension_semantics=("parallel",)),
    )(x, w1, b1r, w2, b2r)


def mlp_forward_transposed(xt, w1, b1, w2, b2, *, tm_max=2048):
    """Lane-dense large-B variant: xt is (d_in, B); returns (d_out, B).

    Output last dim is the batch -> unmasked lane-dense stores and ~10x smaller
    padded VMEM footprint per row. Use when the consumer accepts (10, B).
    """
    d_in, B = xt.shape
    d_out = w2.shape[1]

    xt = xt.astype(jnp.float32)
    w1t = jnp.transpose(w1).astype(jnp.float32)      # (d_h, d_in)  tiny, one-off
    w2t = jnp.transpose(w2).astype(jnp.float32)      # (d_out, d_h)
    b1c = b1.reshape(-1, 1).astype(jnp.float32)      # (d_h, 1)
    b2c = b2.reshape(-1, 1).astype(jnp.float32)      # (d_out, 1)

    tm = _pick_batch_tile(B, tm_max, align=128)      # lane axis -> 128-aligned tiles
    n_blocks = _cdiv(B, tm)

    return pl.pallas_call(
        _mlp_kernel_t,
        out_shape=jax.ShapeDtypeStruct((d_out, B), jnp.float32),
        grid=(n_blocks,),
        in_specs=[
            pl.BlockSpec((d_in, tm), lambda i: (0, i)),
            pl.BlockSpec(w1t.shape, lambda i: (0, 0)),
            pl.BlockSpec(b1c.shape, lambda i: (0, 0)),
            pl.BlockSpec(w2t.shape, lambda i: (0, 0)),
            pl.BlockSpec(b2c.shape, lambda i: (0, 0)),
        ],
        out_specs=pl.BlockSpec((d_out, tm), lambda i: (0, i)),
        compiler_params=pltpu.CompilerParams(
            dimension_semantics=("parallel",)),
    )(xt, w1t, b1c, w2t, b2c)


# ----------------------------------------------------------------------------
# Self-test
# ----------------------------------------------------------------------------
if __name__ == "__main__":
    key = jax.random.PRNGKey(0)
    k_x, k_w1, k_b1, k_w2, k_b2, k_xl = jax.random.split(key, 6)

    d_in, d_h, d_out = D_IN, D_H, D_OUT

    # Weights stored (in, out): kernel computes x @ W + b == PyTorch x @ W_pt.T + b.
    w1 = jax.random.normal(k_w1, (d_in, d_h), dtype=jnp.float32) * 0.1
    b1 = jax.random.normal(k_b1, (d_h,), dtype=jnp.float32) * 0.1
    w2 = jax.random.normal(k_w2, (d_h, d_out), dtype=jnp.float32) * 0.1
    b2 = jax.random.normal(k_b2, (d_out,), dtype=jnp.float32) * 0.1

    def ref_fwd(xv):
        return jax.nn.sigmoid(jnp.maximum(xv @ w1 + b1, 0.0) @ w2 + b2)

    # 1) Small batch (the module's typical use): force the Pallas path so the
    #    kernel itself is exercised; single block equal to the whole batch.
    x_small = jax.random.normal(k_x, (4, d_in), dtype=jnp.float32)
    out_small = mlp_forward(x_small, w1, b1, w2, b2, force_pallas=True)
    jax.block_until_ready(out_small)
    assert out_small.shape == (4, d_out)
    assert jnp.allclose(out_small, ref_fwd(x_small), atol=2e-5), "small-batch mismatch"

    # 2) Larger batch with a ragged final block: multi-block grid, clipped tail.
    x_big = jax.random.normal(k_xl, (2000, d_in), dtype=jnp.float32)
    out_big = mlp_forward(x_big, w1, b1, w2, b2, tm_max=512)
    jax.block_until_ready(out_big)
    assert out_big.shape == (2000, d_out)
    assert jnp.allclose(out_big, ref_fwd(x_big), atol=2e-5), "big-batch mismatch"

    # 3) Lane-dense transposed variant (batch on lanes), same numbers.
    out_t = mlp_forward_transposed(x_big.T, w1, b1, w2, b2, tm_max=512)
    jax.block_until_ready(out_t)
    assert out_t.shape == (d_out, 2000)
    assert jnp.allclose(out_t.T, ref_fwd(x_big), atol=2e-5), "transposed mismatch"

    # 4) Tiny-batch XLA fallback path agrees too.
    out_fb = mlp_forward(x_small, w1, b1, w2, b2)
    assert jnp.allclose(out_fb, ref_fwd(x_small), atol=2e-5), "fallback mismatch"

    print("KERNEL_OK")
</pallas_src>

<mosaic_0001>
module attributes {stable_mosaic.version = 11 : i64} {
  func.func @_mlp_kernel(%arg0: i32, %arg1: memref<4x5xf32, #tpu.memory_space<vmem>>, %arg2: memref<5x8xf32, #tpu.memory_space<vmem>>, %arg3: memref<1x8xf32, #tpu.memory_space<vmem>>, %arg4: memref<8x10xf32, #tpu.memory_space<vmem>>, %arg5: memref<1x10xf32, #tpu.memory_space<vmem>>, %arg6: memref<4x10xf32, #tpu.memory_space<vmem>>) attributes {dimension_semantics = [#tpu.dimension_semantics<parallel>], iteration_bounds = array<i64: 1>, scalar_prefetch = 0 : i64, scratch_operands = 0 : i64, tpu.core_type = #tpu.core_type<tc>, window_params = [{transform_indices = @transform_0, window_bounds = array<i64: 4, 5>}, {pipeline_mode = #tpu.pipeline_mode<synchronous>, transform_indices = @transform_1, window_bounds = array<i64: 5, 8>}, {pipeline_mode = #tpu.pipeline_mode<synchronous>, transform_indices = @transform_2, window_bounds = array<i64: 1, 8>}, {pipeline_mode = #tpu.pipeline_mode<synchronous>, transform_indices = @transform_3, window_bounds = array<i64: 8, 10>}, {pipeline_mode = #tpu.pipeline_mode<synchronous>, transform_indices = @transform_4, window_bounds = array<i64: 1, 10>}, {transform_indices = @transform_5, window_bounds = array<i64: 4, 10>}]} {
    %c0 = arith.constant 0 : index
    %c0_0 = arith.constant 0 : index
    %0 = vector.load %arg1[%c0, %c0_0] : memref<4x5xf32, #tpu.memory_space<vmem>>, vector<4x5xf32>
    %c0_1 = arith.constant 0 : index
    %c0_2 = arith.constant 0 : index
    %1 = vector.load %arg2[%c0_1, %c0_2] : memref<5x8xf32, #tpu.memory_space<vmem>>, vector<5x8xf32>
    %cst = arith.constant dense<0.000000e+00> : vector<4x8xf32>
    %2 = tpu.matmul %0, %1, %cst {dimension_numbers = #tpu.dot_dimension_numbers<[1], [0], [0], [1], [0, 0, 1, 1], [], []>} : vector<4x5xf32>, vector<5x8xf32>, vector<4x8xf32> -> vector<4x8xf32>
    %c0_3 = arith.constant 0 : index
    %c0_4 = arith.constant 0 : index
    %3 = vector.load %arg3[%c0_3, %c0_4] : memref<1x8xf32, #tpu.memory_space<vmem>>, vector<1x8xf32>
    %4 = vector.broadcast %3 : vector<1x8xf32> to vector<4x8xf32>
    %5 = arith.addf %2, %4 : vector<4x8xf32>
    %cst_5 = arith.constant 0.000000e+00 : f32
    %6 = vector.broadcast %cst_5 : f32 to vector<4x8xf32>
    %7 = arith.maximumf %5, %6 : vector<4x8xf32>
    %c0_6 = arith.constant 0 : index
    %c0_7 = arith.constant 0 : index
    %8 = vector.load %arg4[%c0_6, %c0_7] : memref<8x10xf32, #tpu.memory_space<vmem>>, vector<8x10xf32>
    %cst_8 = arith.constant dense<0.000000e+00> : vector<4x10xf32>
    %9 = tpu.matmul %7, %8, %cst_8 {dimension_numbers = #tpu.dot_dimension_numbers<[1], [0], [0], [1], [0, 0, 1, 1], [], []>} : vector<4x8xf32>, vector<8x10xf32>, vector<4x10xf32> -> vector<4x10xf32>
    %c0_9 = arith.constant 0 : index
    %c0_10 = arith.constant 0 : index
    %10 = vector.load %arg5[%c0_9, %c0_10] : memref<1x10xf32, #tpu.memory_space<vmem>>, vector<1x10xf32>
    %11 = vector.broadcast %10 : vector<1x10xf32> to vector<4x10xf32>
    %12 = arith.addf %9, %11 : vector<4x10xf32>
    %cst_11 = arith.constant 0.000000e+00 : f32
    %13 = vector.broadcast %cst_11 : f32 to vector<4x10xf32>
    %14 = arith.subf %13, %12 : vector<4x10xf32>
    %15 = math.exp %14 : vector<4x10xf32>
    %cst_12 = arith.constant 1.000000e+00 : f32
    %16 = vector.broadcast %cst_12 : f32 to vector<4x10xf32>
    %17 = arith.addf %16, %15 : vector<4x10xf32>
    %cst_13 = arith.constant 1.000000e+00 : f32
    %18 = vector.broadcast %cst_13 : f32 to vector<4x10xf32>
    %19 = arith.divf %18, %17 : vector<4x10xf32>
    %c0_14 = arith.constant 0 : index
    %c0_15 = arith.constant 0 : index
    %20 = vector.load %arg6[%c0_14, %c0_15] : memref<4x10xf32, #tpu.memory_space<vmem>>, vector<4x10xf32>
    tpu.vector_store %arg6[%c0_14, %c0_15], %19 {strides = array<i32>} : memref<4x10xf32, #tpu.memory_space<vmem>>, vector<4x10xf32>,
    return
  }
  func.func @transform_0(%arg0: i32) -> (i32, i32) {
    %c0_i32 = arith.constant 0 : i32
    %c0_i32_0 = arith.constant 0 : i32
    return %arg0, %c0_i32 : i32, i32
  }
  func.func @transform_1(%arg0: i32) -> (i32, i32) {
    %c0_i32 = arith.constant 0 : i32
    %c0_i32_0 = arith.constant 0 : i32
    %c0_i32_1 = arith.constant 0 : i32
    return %c0_i32, %c0_i32_0 : i32, i32
  }
  func.func @transform_2(%arg0: i32) -> (i32, i32) {
    %c0_i32 = arith.constant 0 : i32
    %c0_i32_0 = arith.constant 0 : i32
    %c0_i32_1 = arith.constant 0 : i32
    return %c0_i32, %c0_i32_0 : i32, i32
  }
  func.func @transform_3(%arg0: i32) -> (i32, i32) {
    %c0_i32 = arith.constant 0 : i32
    %c0_i32_0 = arith.constant 0 : i32
    %c0_i32_1 = arith.constant 0 : i32
    return %c0_i32, %c0_i32_0 : i32, i32
  }
  func.func @transform_4(%arg0: i32) -> (i32, i32) {
    %c0_i32 = arith.constant 0 : i32
    %c0_i32_0 = arith.constant 0 : i32
    %c0_i32_1 = arith.constant 0 : i32
    return %c0_i32, %c0_i32_0 : i32, i32
  }
  func.func @transform_5(%arg0: i32) -> (i32, i32) {
    %c0_i32 = arith.constant 0 : i32
    %c0_i32_0 = arith.constant 0 : i32
    return %arg0, %c0_i32 : i32, i32
  }
}

</mosaic_0001>

<llo_original>
// kernel: tpu_custom_call.1
$region0: #{tpu_custom_call.1}
  #allocation0 [shape = 'u32[]', space=smem, size = 0x4, offset = 0x4, fixed_abs, tag = 'smem constant byte address 0x4 - core index']
  #allocation1 [shape = 'u32[144,128]{1,0:T(1,128)}', space=vmem, size = 0x12000, scoped, tag = 'internal scratch']
  %s0 = inlined_call_operand.hbm [shape: f32[4,5], index: 0, kind: input, shape index: {}]
  %s1 = inlined_call_operand.hbm [shape: f32[5,8], index: 1, kind: input, shape index: {}]
  %s2 = inlined_call_operand.vmem [shape: f32[1,8], index: 2, kind: input, shape index: {}]
  %s3 = inlined_call_operand.vmem [shape: f32[8,10], index: 3, kind: input, shape index: {}]
  %s4 = inlined_call_operand.vmem [shape: f32[1,10], index: 4, kind: input, shape index: {}]
  %s5 = inlined_call_operand.hbm [shape: f32[4,10], index: 5, kind: output, shape index: {}]
  %s6 = sld [smem:[#allocation0]]
  $region38: #{tpu_custom_call.1} parent=0
    _
  %s8 = ssub.s32 1, %s6
  %s9 = scalar_select 0, %s8, %s6
  $region1: #{tpu_custom_call.1} parent=0
    #allocation2 [shape = 'u8[2048]{0}', space=vmem, size = 0x800, scoped, tag = 'input window, operand 0, single buffered']
    #allocation3 [shape = 's32[1]{0}', space=sflag, size = 0x4, scoped, tag = 'scoped memory for tpu_custom_call.1']
    #allocation4 [shape = 's32[1]{0}', space=sflag, size = 0x4, scoped, tag = 'scoped memory for tpu_custom_call.1']
    #allocation5 [shape = 'u8[4096]{0}', space=vmem, size = 0x1000, scoped, tag = 'input window, operand 1, single buffered']
    #allocation6 [shape = 's32[1]{0}', space=sflag, size = 0x4, scoped, tag = 'scoped memory for tpu_custom_call.1']
    #allocation7 [shape = 'u8[2048]{0}', space=vmem, size = 0x800, scoped, tag = 'output window, operand 0, single buffered']
    %10 = vsyncpa [#allocation3], 0
    %11 = vsyncpa [#allocation6], 0
    %12 = vsyncpa [#allocation4], 0
    // Predicated region
    $region2: #{tpu_custom_call.1} parent=1 // pred_check
      _
    $region3: #{tpu_custom_call.1} parent=1 // pred_check_branch
      %14 = sbr.rel (0) target = $region5
    $region4: #{tpu_custom_call.1} parent=1 // pred_region
      %s16 = ssub.s32 64, 64
      %17 = vsyncadd [#allocation3], %s16
      %s19 = sshll.u32 [#allocation2], 4
      %s20 = int_to_ptr.vmem [resolvable:$true] %s19
      %22 = dma.hbm_to_vmem [thread:$0]  %s0, 64, %s20, [#allocation3]
    $region5: #{tpu_custom_call.1} parent=1 // pred_fallthru
      _
    // Predicated region
    $region6: #{tpu_custom_call.1} parent=1 // pred_check
      _
    $region7: #{tpu_custom_call.1} parent=1 // pred_check_branch
      %24 = sbr.rel (0) target = $region9
    $region8: #{tpu_custom_call.1} parent=1 // pred_region
      %s26 = ssub.s32 128, 128
      %27 = vsyncadd [#allocation6], %s26
      %s29 = sshll.u32 [#allocation5], 4
      %s30 = int_to_ptr.vmem [resolvable:$true] %s29
      %32 = dma.hbm_to_vmem [thread:$0]  %s1, 128, %s30, [#allocation6]
    $region9: #{tpu_custom_call.1} parent=1 // pred_fallthru
      _
    // Predicated region
    $region10: #{tpu_custom_call.1} parent=1 // pred_check
      _
    $region11: #{tpu_custom_call.1} parent=1 // pred_check_branch
      %34 = sbr.rel (0) target = $region13
    $region12: #{tpu_custom_call.1} parent=1 // pred_region
      _
    $region13: #{tpu_custom_call.1} parent=1 // pred_fallthru
      _
    // Predicated region
    $region14: #{tpu_custom_call.1} parent=1 // pred_check
      _
    $region15: #{tpu_custom_call.1} parent=1 // pred_check_branch
      %36 = sbr.rel (0) target = $region17
    $region16: #{tpu_custom_call.1} parent=1 // pred_region
      _
    $region17: #{tpu_custom_call.1} parent=1 // pred_fallthru
      _
    // Predicated region
    $region18: #{tpu_custom_call.1} parent=1 // pred_check
      _
    $region19: #{tpu_custom_call.1} parent=1 // pred_check_branch
      %38 = sbr.rel (0) target = $region21
    $region20: #{tpu_custom_call.1} parent=1 // pred_region
      _
    $region21: #{tpu_custom_call.1} parent=1 // pred_fallthru
      _
    // Predicated region
    $region22: #{tpu_custom_call.1} parent=1 // pred_check
      _
    $region23: #{tpu_custom_call.1} parent=1 // pred_check_branch
      %40 = sbr.rel (0) target = $region25
    $region24: #{tpu_custom_call.1} parent=1 // pred_region
      %41 = dma.done [#allocation3], 64
    $region25: #{tpu_custom_call.1} parent=1 // pred_fallthru
      _
    // Predicated region
    $region26: #{tpu_custom_call.1} parent=1 // pred_check
      _
    $region27: #{tpu_custom_call.1} parent=1 // pred_check_branch
      %43 = sbr.rel (0) target = $region29
    $region28: #{tpu_custom_call.1} parent=1 // pred_region
      %44 = dma.done [#allocation6], 128
    $region29: #{tpu_custom_call.1} parent=1 // pred_fallthru
      _
    %v45 = vld [vmem:[#allocation2] sm:$0xf]
    %v46 = vld [vmem:[#allocation5] sm:$0x1f]
    %v47 = vld [vmem:[%s2] sm:$0x1]
    %v49 = vlaneseq
    %v50 = vshrl.u32 %v49, 7
    %v51 = vsub.s32 0, %v50
    %v52 = vrot.slane %v47, %v51
    %vm54 = vcmask 39936
    %v56 = vsel %vm54, %v45, 0
    %vm58 = vcmask 1044480
    %v60 = vsel %vm58, %v46, 0
    %62 = vmatprep.subr.mxu0 0.0
    %63 = vmatpush1.msra.mxu0 %v60
    %64 = vmatprep.subr.mxu0 0.0
    %65 = vmatpush1.msra.mxu0 0.0
    %66 = vmatprep.subr.mxu0 0.0
    %67 = vmatpush1.msra.mxu0 0.0
    %68 = vmatprep.subr.mxu0 0.0
    %69 = vmatpush1.msra.mxu0 0.0
    %70 = vmatprep.subr.mxu0 0.0
    %71 = vmatpush1.msra.mxu0 0.0
    %72 = vmatprep.subr.mxu0 0.0
    %73 = vmatpush1.msra.mxu0 0.0
    %74 = vmatprep.subr.mxu0 0.0
    %75 = vmatpush1.msra.mxu0 0.0
    %76 = vmatprep.subr.mxu0 0.0
    %77 = vmatpush1.msra.mxu0 0.0
    %78 = vmatprep.subr.mxu0 0.0
    %79 = vmatpush1.msra.mxu0 0.0
    %80 = vmatprep.subr.mxu0 0.0
    %81 = vmatpush1.msra.mxu0 0.0
    %82 = vmatprep.subr.mxu0 0.0
    %83 = vmatpush1.msra.mxu0 0.0
    %84 = vmatprep.subr.mxu0 0.0
    %85 = vmatpush1.msra.mxu0 0.0
    %86 = vmatprep.subr.mxu0 0.0
    %87 = vmatpush1.msra.mxu0 0.0
    %88 = vmatprep.subr.mxu0 0.0
    %89 = vmatpush1.msra.mxu0 0.0
    %90 = vmatprep.subr.mxu0 0.0
    %91 = vmatpush1.msra.mxu0 0.0
    %92 = vmatprep.subr.mxu0 0.0
    %93 = vmatpush1.msra.mxu0 0.0
    %94 = vmatprep.subr.mxu0 0.0
    %95 = vmatpush1.msra.mxu0 0.0
    %96 = vmatprep.subr.mxu0 0.0
    %97 = vmatpush1.msra.mxu0 0.0
    %98 = vmatprep.subr.mxu0 0.0
    %99 = vmatpush1.msra.mxu0 0.0
    %100 = vmatprep.subr.mxu0 0.0
    %101 = vmatpush1.msra.mxu0 0.0
    %102 = vmatprep.subr.mxu0 0.0
    %103 = vmatpush1.msra.mxu0 0.0
    %104 = vmatprep.subr.mxu0 0.0
    %105 = vmatpush1.msra.mxu0 0.0
    %106 = vmatprep.subr.mxu0 0.0
    %107 = vmatpush1.msra.mxu0 0.0
    %108 = vmatprep.subr.mxu0 0.0
    %109 = vmatpush1.msra.mxu0 0.0
    %110 = vmatprep.subr.mxu0 0.0
    %111 = vmatpush1.msra.mxu0 0.0
    %112 = vmatprep.subr.mxu0 0.0
    %113 = vmatpush1.msra.mxu0 0.0
    %114 = vmatprep.subr.mxu0 0.0
    %115 = vmatpush1.msra.mxu0 0.0
    %116 = vmatprep.subr.mxu0 0.0
    %117 = vmatpush1.msra.mxu0 0.0
    %118 = vmatprep.subr.mxu0 0.0
    %119 = vmatpush1.msra.mxu0 0.0
    %120 = vmatprep.subr.mxu0 0.0
    %121 = vmatpush1.msra.mxu0 0.0
    %122 = vmatprep.subr.mxu0 0.0
    %123 = vmatpush1.msra.mxu0 0.0
    %124 = vmatprep.subr.mxu0 0.0
    %125 = vmatpush1.msra.mxu0 0.0
    %126 = vmatprep.mubr.f32.mxu0 0.0
    %127 = vmatmul.mubr.f32.gmra.mrb[0].mxu0 %v56
    %v128 = vpop.f32.mrb[0].mxu0
    %v129 = vadd.f32 %v52, %v128
    %v130 = vpop.f32.mrb[0].mxu0
    %131 = vdwg.mxu0
    %v132 = vmax.f32 %v129, 0.0
    %v133 = vld [vmem:[%s3] sm:$0xff]
    %v134 = vld [vmem:[%s4] sm:$0x1]
    %v136 = vlaneseq
    %v137 = vshrl.u32 %v136, 7
    %v138 = vsub.s32 0, %v137
    %v139 = vrot.slane %v134, %v138
    %vm141 = vcmask 64512
    %v143 = vsel %vm141, %v132, 0
    %145 = vmatprep.subr.mxu0 0.0
    %146 = vmatpush1.msra.mxu0 %v133
    %147 = vmatprep.subr.mxu0 0.0
    %148 = vmatpush1.msra.mxu0 0.0
    %149 = vmatprep.subr.mxu0 0.0
    %150 = vmatpush1.msra.mxu0 0.0
    %151 = vmatprep.subr.mxu0 0.0
    %152 = vmatpush1.msra.mxu0 0.0
    %153 = vmatprep.subr.mxu0 0.0
    %154 = vmatpush1.msra.mxu0 0.0
    %155 = vmatprep.subr.mxu0 0.0
    %156 = vmatpush1.msra.mxu0 0.0
    %157 = vmatprep.subr.mxu0 0.0
    %158 = vmatpush1.msra.mxu0 0.0
    %159 = vmatprep.subr.mxu0 0.0
    %160 = vmatpush1.msra.mxu0 0.0
    %161 = vmatprep.subr.mxu0 0.0
    %162 = vmatpush1.msra.mxu0 0.0
    %163 = vmatprep.subr.mxu0 0.0
    %164 = vmatpush1.msra.mxu0 0.0
    %165 = vmatprep.subr.mxu0 0.0
    %166 = vmatpush1.msra.mxu0 0.0
    %167 = vmatprep.subr.mxu0 0.0
    %168 = vmatpush1.msra.mxu0 0.0
    %169 = vmatprep.subr.mxu0 0.0
    %170 = vmatpush1.msra.mxu0 0.0
    %171 = vmatprep.subr.mxu0 0.0
    %172 = vmatpush1.msra.mxu0 0.0
    %173 = vmatprep.subr.mxu0 0.0
    %174 = vmatpush1.msra.mxu0 0.0
    %175 = vmatprep.subr.mxu0 0.0
    %176 = vmatpush1.msra.mxu0 0.0
    %177 = vmatprep.subr.mxu0 0.0
    %178 = vmatpush1.msra.mxu0 0.0
    %179 = vmatprep.subr.mxu0 0.0
    %180 = vmatpush1.msra.mxu0 0.0
    %181 = vmatprep.subr.mxu0 0.0
    %182 = vmatpush1.msra.mxu0 0.0
    %183 = vmatprep.subr.mxu0 0.0
    %184 = vmatpush1.msra.mxu0 0.0
    %185 = vmatprep.subr.mxu0 0.0
    %186 = vmatpush1.msra.mxu0 0.0
    %187 = vmatprep.subr.mxu0 0.0
    %188 = vmatpush1.msra.mxu0 0.0
    %189 = vmatprep.subr.mxu0 0.0
    %190 = vmatpush1.msra.mxu0 0.0
    %191 = vmatprep.subr.mxu0 0.0
    %192 = vmatpush1.msra.mxu0 0.0
    %193 = vmatprep.subr.mxu0 0.0
    %194 = vmatpush1.msra.mxu0 0.0
    %195 = vmatprep.subr.mxu0 0.0
    %196 = vmatpush1.msra.mxu0 0.0
    %197 = vmatprep.subr.mxu0 0.0
    %198 = vmatpush1.msra.mxu0 0.0
    %199 = vmatprep.subr.mxu0 0.0
    %200 = vmatpush1.msra.mxu0 0.0
    %201 = vmatprep.subr.mxu0 0.0
    %202 = vmatpush1.msra.mxu0 0.0
    %203 = vmatprep.subr.mxu0 0.0
    %204 = vmatpush1.msra.mxu0 0.0
    %205 = vmatprep.subr.mxu0 0.0
    %206 = vmatpush1.msra.mxu0 0.0
    %207 = vmatprep.subr.mxu0 0.0
    %208 = vmatpush1.msra.mxu0 0.0
    %209 = vmatprep.mubr.f32.mxu0 0.0
    %210 = vmatmul.mubr.f32.gmra.mrb[0].mxu0 %v143
    %v211 = vpop.f32.mrb[0].mxu0
    %v212 = vadd.f32 %v139, %v211
    %v213 = vpop.f32.mrb[0].mxu0
    %214 = vdwg.mxu0
    %v215 = vsub.f32 0.0, %v212
    %v216 = vmul.f32 %v215, 1.442695
    %v217 = vpow.pop %v216
    %v218 = vadd.f32 %v217, 1.0
    %v219 = vrcp.pop %v218
    %v220 = vmul.f32 1.0, %v219
    %vm221 = vcmask 76800
    %222 = vst.msk [vmem:[#allocation7] sm:$0xf] %vm221, %v220
    // Predicated region
    $region30: #{tpu_custom_call.1} parent=1 // pred_check
      _
    $region31: #{tpu_custom_call.1} parent=1 // pred_check_branch
      %224 = sbr.rel (0) target = $region33
    $region32: #{tpu_custom_call.1} parent=1 // pred_region
      %s226 = ssub.s32 64, 64
      %227 = vsyncadd [#allocation4], %s226
      %s229 = sshll.u32 [#allocation7], 4
      %s230 = int_to_ptr.vmem [resolvable:$true] %s229
      %232 = dma.vmem_to_hbm [thread:$0]  %s230, 64, %s5, [#allocation4]
    $region33: #{tpu_custom_call.1} parent=1 // pred_fallthru
      _
    // Predicated region
    $region34: #{tpu_custom_call.1} parent=1 // pred_check
      _
    $region35: #{tpu_custom_call.1} parent=1 // pred_check_branch
      %234 = sbr.rel (0) target = $region37
    $region36: #{tpu_custom_call.1} parent=1 // pred_region
      %235 = dma.done [#allocation4], 64
    $region37: #{tpu_custom_call.1} parent=1 // pred_fallthru
      _
    %236 = vsyncpa [#allocation3], 1
    %237 = vsyncpa [#allocation6], 1
    %238 = vsyncpa [#allocation4], 1

</llo_original>
